<compile_context>
chip_gen: v7x
topology: tpu7x:2x2x1
jax: 0.10.0
libtpu: 0.0.40
codegen_flags: <defaults>
</compile_context>

<pallas_src>
import functools

import jax
import jax.numpy as jnp
import numpy as np
from jax import lax
from jax.experimental import pallas as pl
from jax.experimental.pallas import tpu as pltpu


def _make_kernel(*, H, S, num_hidden, skip, chunk, n_chunks):
    """Build a kernel closure. Shapes (TB = batch tile on the lane axis):
      x_ref : (TB, D) f32 (native layout)   w1_ref : (H, D)   bf16   b1_ref : (H, 1)   f32
      wh_ref: (NH, H, H) bf16 (if NH > 0)   bh_ref : (NH, H, 1) f32
      w2_ref: (S, H) bf16                   b2_ref : (S, 1)   f32    out_ref: (S, TB)  f32
    """

    def body(x_ref, w1_ref, b1_ref, wh_ref, bh_ref, w2_ref, b2_ref, out_ref):
        # Tiny weights/biases: load once per grid step. Bias broadcasts stay implicit
        # in the adds (materializing (H, chunk) copies would only add vreg pressure).
        w1 = w1_ref[...]                       # (H, D)  bf16
        w2 = w2_ref[...]                       # (S, H)  bf16
        b1 = b1_ref[...]                       # (H, 1)  f32
        b2 = b2_ref[...]                       # (S, 1)  f32
        if num_hidden > 0:
            wh = wh_ref[...]                   # (NH, H, H) bf16
            bh = bh_ref[...]                   # (NH, H, 1) f32

        # Static unroll over <=512-lane chunks: equivalent straight-line code to
        # lax.fori_loop(..., unroll=True) but with fully static, aligned slice
        # starts.  Each chunk's intermediates die at its store, so the live set
        # stays bounded at one chunk even for 4096-lane batch tiles.
        # TODO(synk): switch to lax.fori_loop(..., unroll=False) if n_chunks grows large.
        for c in range(n_chunks):
            start = c * chunk                                            # static
            xb = x_ref[pl.ds(start, chunk), :].astype(jnp.bfloat16)      # (chunk, D)

            # fc1 + relu: W1 @ x^T as a transposed-RHS contraction (contract W1
            # dim 1 with x dim 1) — batch lands on lanes with no wrapper relayout.
            h = lax.dot_general(w1, xb, (((1,), (1,)), ((), ())),
                                preferred_element_type=jnp.float32) + b1
            h = jnp.maximum(h, 0.0)                                      # (H, chunk) f32

            if num_hidden > 0:
                if skip != 0.0:
                    h_skip = h * skip                                    # x_skip = x * self.skip
                for i in range(num_hidden):                              # NH tiny: static unroll
                    h = jnp.dot(wh[i], h.astype(jnp.bfloat16),
                                preferred_element_type=jnp.float32) + bh[i]
                    h = jnp.maximum(h, 0.0)
                if skip != 0.0:
                    h = h + h_skip

            # fc2
            logits = jnp.dot(w2, h.astype(jnp.bfloat16),
                             preferred_element_type=jnp.float32) + b2    # (S, chunk) f32

            # log_softmax over the class axis (sublanes); batch stays lane-dense.
            m = jnp.max(logits, axis=0, keepdims=True)
            z = logits - m
            lse = jnp.log(jnp.sum(jnp.exp(z), axis=0, keepdims=True))
            out_ref[:, pl.ds(start, chunk)] = z - lse

    if num_hidden > 0:
        def kernel(x_ref, w1_ref, b1_ref, wh_ref, bh_ref, w2_ref, b2_ref, out_ref):
            body(x_ref, w1_ref, b1_ref, wh_ref, bh_ref, w2_ref, b2_ref, out_ref)
    else:
        def kernel(x_ref, w1_ref, b1_ref, w2_ref, b2_ref, out_ref):
            body(x_ref, w1_ref, b1_ref, None, None, w2_ref, b2_ref, out_ref)
    return kernel


def _pick_block_b(B):
    """Largest 128-aligned batch tile (<=4096) that keeps the grid at >=4 steps when
    the batch allows it (v7x dual-TC + per-TC double-buffering), >=2 otherwise."""
    b128 = pl.cdiv(B, 128) * 128
    for tb in (4096, 2048, 1024, 512, 256, 128):
        if tb * 4 <= b128:
            return tb
    return 128 if b128 >= 256 else b128


def tentacle_net(x, params, *, num_hidden: int, skip: int,
                 block_b=None, class_major: bool = False):
    """x: (B, D) f32; params in PyTorch [out, in] layout.
    Returns (B, S) f32 log-probs, or (S, B) lane-dense if class_major=True."""
    w1, b1, wh, bh, w2, b2 = params
    B, D = x.shape
    H = w1.shape[0]
    S = w2.shape[0]
    NH = wh.shape[0] if num_hidden > 0 else 0

    TB = block_b if block_b is not None else _pick_block_b(B)
    assert TB % 128 == 0, "batch tile must be a multiple of 128 lanes"
    B_pad = pl.cdiv(B, TB) * TB
    if B_pad != B:
        # Pad instead of collapsing to a single grid step: keeps the lane-dense,
        # multi-step (pipelined / dual-TC) path for arbitrary batch sizes.
        x = jnp.pad(x, ((0, B_pad - B), (0, 0)))

    # In-kernel chunking of each batch tile (bounds vreg pressure at <=512 lanes).
    chunk = TB if TB <= 512 else next(c for c in (512, 256, 128) if TB % c == 0)
    n_chunks = TB // chunk

    # bf16 MXU operands, f32 biases; PyTorch [out, in] layout throughout.
    w1b = w1.astype(jnp.bfloat16)                      # (H, D)
    w2b = w2.astype(jnp.bfloat16)                      # (S, H)
    b1c = b1.reshape(H, 1).astype(jnp.float32)
    b2c = b2.reshape(S, 1).astype(jnp.float32)

    in_specs = [
        pl.BlockSpec((TB, D), lambda i: (i, 0)),       # x: streamed per batch tile (native layout)
        pl.BlockSpec((H, D), lambda i: (0, 0)),        # weights/biases: VMEM-resident
        pl.BlockSpec((H, 1), lambda i: (0, 0)),
    ]
    args = [x, w1b, b1c]
    if num_hidden > 0:
        whb = wh.astype(jnp.bfloat16)                  # (NH, H, H)
        bhc = bh.reshape(NH, H, 1).astype(jnp.float32)
        in_specs += [
            pl.BlockSpec((NH, H, H), lambda i: (0, 0, 0)),
            pl.BlockSpec((NH, H, 1), lambda i: (0, 0, 0)),
        ]
        args += [whb, bhc]
    in_specs += [
        pl.BlockSpec((S, H), lambda i: (0, 0)),
        pl.BlockSpec((S, 1), lambda i: (0, 0)),
    ]
    args += [w2b, b2c]

    kernel = _make_kernel(H=H, S=S, num_hidden=num_hidden, skip=float(skip),
                          chunk=chunk, n_chunks=n_chunks)

    flops = 2 * B_pad * (D * H + num_hidden * H * H + H * S)
    transcendentals = B_pad * (S + 1)                  # exp per class + log per row
    bytes_accessed = (B_pad * D * 4 + S * B_pad * 4
                      + (H * D + S * H + NH * H * H) * 2
                      + (H + S + NH * H) * 4)

    out_t = pl.pallas_call(
        kernel,
        out_shape=jax.ShapeDtypeStruct((S, B_pad), jnp.float32),
        grid_spec=pltpu.PrefetchScalarGridSpec(
            num_scalar_prefetch=0,
            grid=(B_pad // TB,),
            in_specs=in_specs,
            out_specs=pl.BlockSpec((S, TB), lambda i: (0, i)),
        ),
        compiler_params=pltpu.CompilerParams(
            dimension_semantics=("parallel",),         # independent batch tiles -> v7x dual-TC
            vmem_limit_bytes=8 * 1024 * 1024,          # actual footprint <2 MiB even at TB=4096
        ),
        cost_estimate=pl.CostEstimate(
            flops=flops, transcendentals=transcendentals, bytes_accessed=bytes_accessed),
    )(*args)

    if B_pad != B:
        out_t = out_t[:, :B]
    if class_major:
        return out_t                                   # (S, B) lane-dense — no trailing relayout
    return out_t.T                                     # (B, S), matches PyTorch forward layout


def init_params(key, input_size, num_subclasses, num_hidden):
    """PyTorch nn.Linear-style init (U(-1/sqrt(fan_in), +1/sqrt(fan_in))),
    weights in PyTorch's [out, in] layout, all f32."""
    H = 2 * num_subclasses

    def linear(k, fan_in, fan_out):
        kw, kb = jax.random.split(k)
        bound = 1.0 / np.sqrt(fan_in)
        w = jax.random.uniform(kw, (fan_out, fan_in), jnp.float32, -bound, bound)
        b = jax.random.uniform(kb, (fan_out,), jnp.float32, -bound, bound)
        return w, b

    keys = jax.random.split(key, 2 + max(num_hidden, 1))
    w1, b1 = linear(keys[0], input_size, H)
    w2, b2 = linear(keys[1], H, num_subclasses)
    if num_hidden > 0:
        whs, bhs = [], []
        for i in range(num_hidden):
            w, b = linear(keys[2 + i], H, H)
            whs.append(w)
            bhs.append(b)
        wh = jnp.stack(whs)                            # (num_hidden, H, H)
        bh = jnp.stack(bhs)                            # (num_hidden, H)
    else:
        wh = jnp.zeros((1, H, H), jnp.float32)         # dummy, never passed to the kernel
        bh = jnp.zeros((1, H), jnp.float32)
    return w1, b1, wh, bh, w2, b2


def reference_forward(x, params, *, num_hidden, skip, matmul_dtype=jnp.float32):
    """Plain-JAX reference of the PyTorch forward.  matmul_dtype=bf16 mirrors the
    kernel's precision policy (bf16 operands, f32 accumulate, f32 elementwise)."""
    w1, b1, wh, bh, w2, b2 = params

    def dot(a, w):  # x @ W.T with operands cast, f32 accumulation
        return jnp.dot(a.astype(matmul_dtype), w.astype(matmul_dtype).T,
                       preferred_element_type=jnp.float32)

    h = jax.nn.relu(dot(x, w1) + b1)
    if num_hidden > 0:
        h_skip = h * skip
        for i in range(num_hidden):
            h = jax.nn.relu(dot(h, wh[i]) + bh[i])
        h = h + h_skip
    logits = dot(h, w2) + b2
    return jax.nn.log_softmax(logits, axis=1)


if __name__ == "__main__":
    key = jax.random.PRNGKey(0)
    kx, kp, kx2, kp2 = jax.random.split(key, 4)

    # Shapes consistent with TentacleNet(input_size, num_subclasses, num_hidden, skip=True).
    B = 1024
    input_size = 32       # genes
    num_subclasses = 8    # -> hidden width 2*num_subclasses = 16
    num_hidden = 2
    skip_val = int(True) + 0          # matches self.skip = skip + 0

    x = jax.random.normal(kx, (B, input_size), jnp.float32)
    params = init_params(kp, input_size, num_subclasses, num_hidden)

    # Default tiling: TB=256 -> grid of 4 "parallel" steps.
    out = jax.block_until_ready(tentacle_net(x, params, num_hidden=num_hidden, skip=skip_val))

    ref_bf16 = reference_forward(x, params, num_hidden=num_hidden, skip=skip_val,
                                 matmul_dtype=jnp.bfloat16)
    np.testing.assert_allclose(np.asarray(out), np.asarray(ref_bf16), rtol=1e-3, atol=1e-3)
    ref_f32 = reference_forward(x, params, num_hidden=num_hidden, skip=skip_val)
    np.testing.assert_allclose(np.asarray(out), np.asarray(ref_f32), rtol=5e-2, atol=5e-2)

    # Fat single tile: exercises the in-kernel multi-chunk path + class-major output.
    out_cm = jax.block_until_ready(
        tentacle_net(x, params, num_hidden=num_hidden, skip=skip_val,
                     block_b=1024, class_major=True))
    np.testing.assert_allclose(np.asarray(out_cm).T, np.asarray(out), rtol=1e-6, atol=1e-6)

    # num_hidden == 0 / skip == 0 variant with a ragged batch (exercises padding path).
    B2, nh0 = 700, 0
    x2 = jax.random.normal(kx2, (B2, input_size), jnp.float32)
    params2 = init_params(kp2, input_size, num_subclasses, nh0)
    out2 = jax.block_until_ready(tentacle_net(x2, params2, num_hidden=nh0, skip=0))
    ref2 = reference_forward(x2, params2, num_hidden=nh0, skip=0, matmul_dtype=jnp.bfloat16)
    np.testing.assert_allclose(np.asarray(out2), np.asarray(ref2), rtol=1e-3, atol=1e-3)

    print("KERNEL_OK")
</pallas_src>

<mosaic_0001>
module attributes {stable_mosaic.version = 11 : i64} {
  func.func @kernel(%arg0: i32, %arg1: memref<256x32xf32, #tpu.memory_space<vmem>>, %arg2: memref<16x32xbf16, #tpu.memory_space<vmem>>, %arg3: memref<16x1xf32, #tpu.memory_space<vmem>>, %arg4: memref<2x16x16xbf16, #tpu.memory_space<vmem>>, %arg5: memref<2x16x1xf32, #tpu.memory_space<vmem>>, %arg6: memref<8x16xbf16, #tpu.memory_space<vmem>>, %arg7: memref<8x1xf32, #tpu.memory_space<vmem>>, %arg8: memref<8x256xf32, #tpu.memory_space<vmem>>) attributes {dimension_semantics = [#tpu.dimension_semantics<parallel>], iteration_bounds = array<i64: 4>, scalar_prefetch = 0 : i64, scratch_operands = 0 : i64, tpu.core_type = #tpu.core_type<tc>, window_params = [{transform_indices = @transform_0, window_bounds = array<i64: 256, 32>}, {pipeline_mode = #tpu.pipeline_mode<synchronous>, transform_indices = @transform_1, window_bounds = array<i64: 16, 32>}, {pipeline_mode = #tpu.pipeline_mode<synchronous>, transform_indices = @transform_2, window_bounds = array<i64: 16, 1>}, {pipeline_mode = #tpu.pipeline_mode<synchronous>, transform_indices = @transform_3, window_bounds = array<i64: 2, 16, 16>}, {pipeline_mode = #tpu.pipeline_mode<synchronous>, transform_indices = @transform_4, window_bounds = array<i64: 2, 16, 1>}, {pipeline_mode = #tpu.pipeline_mode<synchronous>, transform_indices = @transform_5, window_bounds = array<i64: 8, 16>}, {pipeline_mode = #tpu.pipeline_mode<synchronous>, transform_indices = @transform_6, window_bounds = array<i64: 8, 1>}, {transform_indices = @transform_7, window_bounds = array<i64: 8, 256>}]} {
    %c0 = arith.constant 0 : index
    %c0_0 = arith.constant 0 : index
    %0 = vector.load %arg2[%c0, %c0_0] : memref<16x32xbf16, #tpu.memory_space<vmem>>, vector<16x32xbf16>
    %c0_1 = arith.constant 0 : index
    %c0_2 = arith.constant 0 : index
    %1 = vector.load %arg6[%c0_1, %c0_2] : memref<8x16xbf16, #tpu.memory_space<vmem>>, vector<8x16xbf16>
    %c0_3 = arith.constant 0 : index
    %c0_4 = arith.constant 0 : index
    %2 = vector.load %arg3[%c0_3, %c0_4] : memref<16x1xf32, #tpu.memory_space<vmem>>, vector<16x1xf32>
    %c0_5 = arith.constant 0 : index
    %c0_6 = arith.constant 0 : index
    %3 = vector.load %arg7[%c0_5, %c0_6] : memref<8x1xf32, #tpu.memory_space<vmem>>, vector<8x1xf32>
    %c0_7 = arith.constant 0 : index
    %c0_8 = arith.constant 0 : index
    %c0_9 = arith.constant 0 : index
    %4 = vector.load %arg4[%c0_7, %c0_8, %c0_9] : memref<2x16x16xbf16, #tpu.memory_space<vmem>>, vector<2x16x16xbf16>
    %c0_10 = arith.constant 0 : index
    %c0_11 = arith.constant 0 : index
    %c0_12 = arith.constant 0 : index
    %5 = vector.load %arg5[%c0_10, %c0_11, %c0_12] : memref<2x16x1xf32, #tpu.memory_space<vmem>>, vector<2x16x1xf32>
    %c0_13 = arith.constant 0 : index
    %c0_14 = arith.constant 0 : index
    %6 = vector.load %arg1[%c0_13, %c0_14] : memref<256x32xf32, #tpu.memory_space<vmem>>, vector<256x32xf32>
    %7 = arith.truncf %6 : vector<256x32xf32> to vector<256x32xbf16>
    %cst = arith.constant dense<0.000000e+00> : vector<16x256xf32>
    %8 = tpu.matmul %0, %7, %cst {dimension_numbers = #tpu.dot_dimension_numbers<[1], [1], [0], [0], [0, 0, 1, 0], [], []>} : vector<16x32xbf16>, vector<256x32xbf16>, vector<16x256xf32> -> vector<16x256xf32>
    %9 = vector.broadcast %2 : vector<16x1xf32> to vector<16x256xf32>
    %10 = arith.addf %8, %9 : vector<16x256xf32>
    %cst_15 = arith.constant 0.000000e+00 : f32
    %11 = vector.broadcast %cst_15 : f32 to vector<16x256xf32>
    %12 = arith.maximumf %10, %11 : vector<16x256xf32>
    %cst_16 = arith.constant 1.000000e+00 : f32
    %13 = vector.broadcast %cst_16 : f32 to vector<16x256xf32>
    %14 = arith.mulf %12, %13 : vector<16x256xf32>
    %15 = vector.extract_strided_slice %4 {offsets = [0, 0, 0], sizes = [1, 16, 16], strides = [1, 1, 1]} : vector<2x16x16xbf16> to vector<1x16x16xbf16>
    %16 = vector.shape_cast %15 : vector<1x16x16xbf16> to vector<16x16xbf16>
    %17 = arith.truncf %12 : vector<16x256xf32> to vector<16x256xbf16>
    %cst_17 = arith.constant dense<0.000000e+00> : vector<16x256xf32>
    %18 = tpu.matmul %16, %17, %cst_17 {dimension_numbers = #tpu.dot_dimension_numbers<[1], [0], [0], [1], [0, 0, 1, 1], [], []>} : vector<16x16xbf16>, vector<16x256xbf16>, vector<16x256xf32> -> vector<16x256xf32>
    %19 = vector.extract_strided_slice %5 {offsets = [0, 0, 0], sizes = [1, 16, 1], strides = [1, 1, 1]} : vector<2x16x1xf32> to vector<1x16x1xf32>
    %20 = vector.shape_cast %19 : vector<1x16x1xf32> to vector<16x1xf32>
    %21 = vector.broadcast %20 : vector<16x1xf32> to vector<16x256xf32>
    %22 = arith.addf %18, %21 : vector<16x256xf32>
    %cst_18 = arith.constant 0.000000e+00 : f32
    %23 = vector.broadcast %cst_18 : f32 to vector<16x256xf32>
    %24 = arith.maximumf %22, %23 : vector<16x256xf32>
    %25 = vector.extract_strided_slice %4 {offsets = [1, 0, 0], sizes = [1, 16, 16], strides = [1, 1, 1]} : vector<2x16x16xbf16> to vector<1x16x16xbf16>
    %26 = vector.shape_cast %25 : vector<1x16x16xbf16> to vector<16x16xbf16>
    %27 = arith.truncf %24 : vector<16x256xf32> to vector<16x256xbf16>
    %cst_19 = arith.constant dense<0.000000e+00> : vector<16x256xf32>
    %28 = tpu.matmul %26, %27, %cst_19 {dimension_numbers = #tpu.dot_dimension_numbers<[1], [0], [0], [1], [0, 0, 1, 1], [], []>} : vector<16x16xbf16>, vector<16x256xbf16>, vector<16x256xf32> -> vector<16x256xf32>
    %29 = vector.extract_strided_slice %5 {offsets = [1, 0, 0], sizes = [1, 16, 1], strides = [1, 1, 1]} : vector<2x16x1xf32> to vector<1x16x1xf32>
    %30 = vector.shape_cast %29 : vector<1x16x1xf32> to vector<16x1xf32>
    %31 = vector.broadcast %30 : vector<16x1xf32> to vector<16x256xf32>
    %32 = arith.addf %28, %31 : vector<16x256xf32>
    %cst_20 = arith.constant 0.000000e+00 : f32
    %33 = vector.broadcast %cst_20 : f32 to vector<16x256xf32>
    %34 = arith.maximumf %32, %33 : vector<16x256xf32>
    %35 = arith.addf %34, %14 : vector<16x256xf32>
    %36 = arith.truncf %35 : vector<16x256xf32> to vector<16x256xbf16>
    %cst_21 = arith.constant dense<0.000000e+00> : vector<8x256xf32>
    %37 = tpu.matmul %1, %36, %cst_21 {dimension_numbers = #tpu.dot_dimension_numbers<[1], [0], [0], [1], [0, 0, 1, 1], [], []>} : vector<8x16xbf16>, vector<16x256xbf16>, vector<8x256xf32> -> vector<8x256xf32>
    %38 = vector.broadcast %3 : vector<8x1xf32> to vector<8x256xf32>
    %39 = arith.addf %37, %38 : vector<8x256xf32>
    %cst_22 = arith.constant dense<0xFF800000> : vector<256xf32>
    %40 = vector.multi_reduction <maximumf>, %39, %cst_22 [0] : vector<8x256xf32> to vector<256xf32>
    %41 = vector.shape_cast %40 : vector<256xf32> to vector<1x256xf32>
    %42 = vector.broadcast %41 : vector<1x256xf32> to vector<8x256xf32>
    %43 = arith.subf %39, %42 : vector<8x256xf32>
    %44 = math.exp %43 : vector<8x256xf32>
    %cst_23 = arith.constant dense<0.000000e+00> : vector<256xf32>
    %45 = vector.multi_reduction <add>, %44, %cst_23 [0] : vector<8x256xf32> to vector<256xf32>
    %46 = vector.shape_cast %45 : vector<256xf32> to vector<1x256xf32>
    %47 = math.log %46 : vector<1x256xf32>
    %48 = vector.broadcast %47 : vector<1x256xf32> to vector<8x256xf32>
    %49 = arith.subf %43, %48 : vector<8x256xf32>
    %c0_24 = arith.constant 0 : index
    %c0_25 = arith.constant 0 : index
    %50 = vector.load %arg8[%c0_24, %c0_25] : memref<8x256xf32, #tpu.memory_space<vmem>>, vector<8x256xf32>
    tpu.vector_store %arg8[%c0_24, %c0_25], %49 {strides = array<i32>} : memref<8x256xf32, #tpu.memory_space<vmem>>, vector<8x256xf32>,
    return
  }
  func.func @transform_0(%arg0: i32) -> (i32, i32) {
    %c0_i32 = arith.constant 0 : i32
    %c0_i32_0 = arith.constant 0 : i32
    return %arg0, %c0_i32 : i32, i32
  }
  func.func @transform_1(%arg0: i32) -> (i32, i32) {
    %c0_i32 = arith.constant 0 : i32
    %c0_i32_0 = arith.constant 0 : i32
    %c0_i32_1 = arith.constant 0 : i32
    return %c0_i32, %c0_i32_0 : i32, i32
  }
  func.func @transform_2(%arg0: i32) -> (i32, i32) {
    %c0_i32 = arith.constant 0 : i32
    %c0_i32_0 = arith.constant 0 : i32
    %c0_i32_1 = arith.constant 0 : i32
    return %c0_i32, %c0_i32_0 : i32, i32
  }
  func.func @transform_3(%arg0: i32) -> (i32, i32, i32) {
    %c0_i32 = arith.constant 0 : i32
    %c0_i32_0 = arith.constant 0 : i32
    %c0_i32_1 = arith.constant 0 : i32
    %c0_i32_2 = arith.constant 0 : i32
    return %c0_i32, %c0_i32_0, %c0_i32_1 : i32, i32, i32
  }
  func.func @transform_4(%arg0: i32) -> (i32, i32, i32) {
    %c0_i32 = arith.constant 0 : i32
    %c0_i32_0 = arith.constant 0 : i32
    %c0_i32_1 = arith.constant 0 : i32
    %c0_i32_2 = arith.constant 0 : i32
    return %c0_i32, %c0_i32_0, %c0_i32_1 : i32, i32, i32
  }
  func.func @transform_5(%arg0: i32) -> (i32, i32) {
    %c0_i32 = arith.constant 0 : i32
    %c0_i32_0 = arith.constant 0 : i32
    %c0_i32_1 = arith.constant 0 : i32
    return %c0_i32, %c0_i32_0 : i32, i32
  }
  func.func @transform_6(%arg0: i32) -> (i32, i32) {
    %c0_i32 = arith.constant 0 : i32
    %c0_i32_0 = arith.constant 0 : i32
    %c0_i32_1 = arith.constant 0 : i32
    return %c0_i32, %c0_i32_0 : i32, i32
  }
  func.func @transform_7(%arg0: i32) -> (i32, i32) {
    %c0_i32 = arith.constant 0 : i32
    %c0_i32_0 = arith.constant 0 : i32
    return %c0_i32, %arg0 : i32, i32
  }
}

</mosaic_0001>

<llo_original>
// kernel: tpu_custom_call.1
$region0: #{tpu_custom_call.1}
  #allocation0 [shape = 'u32[]', space=smem, size = 0x4, offset = 0x4, fixed_abs, tag = 'smem constant byte address 0x4 - core index']
  #allocation1 [shape = 'u32[144,128]{1,0:T(1,128)}', space=vmem, size = 0x12000, scoped, tag = 'internal scratch']
  %s0 = inlined_call_operand.vmem [shape: f32[1024,32], index: 0, kind: input, shape index: {}]
  %s1 = inlined_call_operand.vmem [shape: bf16[16,32], index: 1, kind: input, shape index: {}]
  %s2 = inlined_call_operand.vmem [shape: f32[16,1], index: 2, kind: input, shape index: {}]
  %s3 = inlined_call_operand.vmem [shape: bf16[2,16,16], index: 3, kind: input, shape index: {}]
  %s4 = inlined_call_operand.vmem [shape: f32[2,16,1], index: 4, kind: input, shape index: {}]
  %s5 = inlined_call_operand.vmem [shape: bf16[8,16], index: 5, kind: input, shape index: {}]
  %s6 = inlined_call_operand.vmem [shape: f32[8,1], index: 6, kind: input, shape index: {}]
  %s7 = inlined_call_operand.hbm [shape: f32[8,1024], index: 7, kind: output, shape index: {}]
  %s8 = sld [smem:[#allocation0]]
  $region61: #{tpu_custom_call.1} parent=0
    _
  %s10 = ssub.s32 1, %s8
  %s11 = scalar_select 0, %s10, %s8
  $region1: #{tpu_custom_call.1} parent=0
    #allocation2 [shape = 'u8[16384]{0}', space=vmem, size = 0x4000, scoped, tag = 'output window, operand 0']
    #allocation3 [shape = 's32[2]{0}', space=sflag, size = 0x8, scoped, tag = 'scoped memory for tpu_custom_call.1']
    %12 = vsyncpa [#allocation3], 0
    %s13 = scalar_lea.sflag [#allocation3], 1
    %14 = vsyncpa %s13, 0
    loop: start=0, step=1, limit=6
    $region2: #{tpu_custom_call.1} parent=1 // loop_pre_header
      _
    $region3: #{tpu_custom_call.1} parent=1 // loop_header
      %s16 = sphi 0, %s20
      %p17 = scmp.ge.s32.totalorder %s16, 6
      %s26 = sphi 0, %s28
      %s29 = sphi 0, %s26
      %s30 = sphi 0, %s29
      %s46 = sphi 0, %s30
      %s50 = sphi 0, %s50
      %s52 = sphi 0, %s50
      %s53 = sphi 0, %s52
      %s67 = sphi 0, %s53
      %s71 = sphi 0, %s71
      %s73 = sphi 0, %s71
      %s74 = sphi 0, %s73
      %s88 = sphi 0, %s74
      %s92 = sphi 0, %s92
      %s94 = sphi 0, %s92
      %s95 = sphi 0, %s94
      %s109 = sphi 0, %s95
      %s113 = sphi 0, %s113
      %s115 = sphi 0, %s113
      %s116 = sphi 0, %s115
      %s130 = sphi 0, %s116
      %s134 = sphi 0, %s134
      %s136 = sphi 0, %s134
      %s137 = sphi 0, %s136
      %s151 = sphi 0, %s137
      %s155 = sphi 0, %s155
      %s157 = sphi 0, %s155
      %s158 = sphi 0, %s157
      %s172 = sphi 0, %s158
      %s178 = sphi 0, %s180
      %s181 = sphi 0, %s178
      %s182 = sphi 0, %s181
      %s198 = sphi 0, %s182
    $region4: #{tpu_custom_call.1} parent=1 // loop_header_branch
      %19 = sbr.rel (%p17) target = $region8
    $region5: #{tpu_custom_call.1} parent=1 // loop_body
      %s21 = ssub.s32 %s16, 1
      %s22 = ssub.s32 %s16, 2
      %s23 = sadd.s32 %s16, 1
      %s24 = ssub.s32 %s16, %s23
      %p25 = scmp.eq.s32.totalorder %s24, 0
      %s27 = sadd.s32 %s26, 1
      %s28 = scalar_select %p25, %s26, %s27
      %p31 = pneg %p25
      %p32 = scmp.eq.s32.totalorder %s16, 3
      %p33 = por %p31, %p32
      %p34 = scmp.ne.s32.totalorder %s26, %s29
      %p35 = scmp.eq.s32.totalorder %s16, 0
      %p36 = por %p34, %p35
      %p37 = scmp.ne.s32.totalorder %s26, %s29
      %p38 = scmp.eq.s32.totalorder %s21, 3
      %p39 = por %p37, %p38
      %p40 = scmp.ne.s32.totalorder %s29, %s30
      %p41 = scmp.eq.s32.totalorder %s21, 0
      %p42 = por %p40, %p41
      %p43 = scmp.ne.s32.totalorder %s29, %s30
      %p44 = scmp.eq.s32.totalorder %s22, 3
      %p45 = por %p43, %p44
      %p47 = scmp.ne.s32.totalorder %s30, %s46
      %p48 = scmp.eq.s32.totalorder %s22, 0
      %p49 = por %p47, %p48
      %s51 = sadd.s32 %s50, 1
      %p54 = scmp.eq.s32.totalorder %s16, 3
      %p55 = scmp.ne.s32.totalorder %s50, %s52
      %p56 = scmp.eq.s32.totalorder %s16, 0
      %p57 = por %p55, %p56
      %p58 = scmp.ne.s32.totalorder %s50, %s52
      %p59 = scmp.eq.s32.totalorder %s21, 3
      %p60 = por %p58, %p59
      %p61 = scmp.ne.s32.totalorder %s52, %s53
      %p62 = scmp.eq.s32.totalorder %s21, 0
      %p63 = por %p61, %p62
      %p64 = scmp.ne.s32.totalorder %s52, %s53
      %p65 = scmp.eq.s32.totalorder %s22, 3
      %p66 = por %p64, %p65
      %p68 = scmp.ne.s32.totalorder %s53, %s67
      %p69 = scmp.eq.s32.totalorder %s22, 0
      %p70 = por %p68, %p69
      %s72 = sadd.s32 %s71, 1
      %p75 = scmp.eq.s32.totalorder %s16, 3
      %p76 = scmp.ne.s32.totalorder %s71, %s73
      %p77 = scmp.eq.s32.totalorder %s16, 0
      %p78 = por %p76, %p77
      %p79 = scmp.ne.s32.totalorder %s71, %s73
      %p80 = scmp.eq.s32.totalorder %s21, 3
      %p81 = por %p79, %p80
      %p82 = scmp.ne.s32.totalorder %s73, %s74
      %p83 = scmp.eq.s32.totalorder %s21, 0
      %p84 = por %p82, %p83
      %p85 = scmp.ne.s32.totalorder %s73, %s74
      %p86 = scmp.eq.s32.totalorder %s22, 3
      %p87 = por %p85, %p86
      %p89 = scmp.ne.s32.totalorder %s74, %s88
      %p90 = scmp.eq.s32.totalorder %s22, 0
      %p91 = por %p89, %p90
      %s93 = sadd.s32 %s92, 1
      %p96 = scmp.eq.s32.totalorder %s16, 3
      %p97 = scmp.ne.s32.totalorder %s92, %s94
      %p98 = scmp.eq.s32.totalorder %s16, 0
      %p99 = por %p97, %p98
      %p100 = scmp.ne.s32.totalorder %s92, %s94
      %p101 = scmp.eq.s32.totalorder %s21, 3
      %p102 = por %p100, %p101
      %p103 = scmp.ne.s32.totalorder %s94, %s95
      %p104 = scmp.eq.s32.totalorder %s21, 0
      %p105 = por %p103, %p104
      %p106 = scmp.ne.s32.totalorder %s94, %s95
      %p107 = scmp.eq.s32.totalorder %s22, 3
      %p108 = por %p106, %p107
      %p110 = scmp.ne.s32.totalorder %s95, %s109
      %p111 = scmp.eq.s32.totalorder %s22, 0
      %p112 = por %p110, %p111
      %s114 = sadd.s32 %s113, 1
      %p117 = scmp.eq.s32.totalorder %s16, 3
      %p118 = scmp.ne.s32.totalorder %s113, %s115
      %p119 = scmp.eq.s32.totalorder %s16, 0
      %p120 = por %p118, %p119
      %p121 = scmp.ne.s32.totalorder %s113, %s115
      %p122 = scmp.eq.s32.totalorder %s21, 3
      %p123 = por %p121, %p122
      %p124 = scmp.ne.s32.totalorder %s115, %s116
      %p125 = scmp.eq.s32.totalorder %s21, 0
      %p126 = por %p124, %p125
      %p127 = scmp.ne.s32.totalorder %s115, %s116
      %p128 = scmp.eq.s32.totalorder %s22, 3
      %p129 = por %p127, %p128
      %p131 = scmp.ne.s32.totalorder %s116, %s130
      %p132 = scmp.eq.s32.totalorder %s22, 0
      %p133 = por %p131, %p132
      %s135 = sadd.s32 %s134, 1
      %p138 = scmp.eq.s32.totalorder %s16, 3
      %p139 = scmp.ne.s32.totalorder %s134, %s136
      %p140 = scmp.eq.s32.totalorder %s16, 0
      %p141 = por %p139, %p140
      %p142 = scmp.ne.s32.totalorder %s134, %s136
      %p143 = scmp.eq.s32.totalorder %s21, 3
      %p144 = por %p142, %p143
      %p145 = scmp.ne.s32.totalorder %s136, %s137
      %p146 = scmp.eq.s32.totalorder %s21, 0
      %p147 = por %p145, %p146
      %p148 = scmp.ne.s32.totalorder %s136, %s137
      %p149 = scmp.eq.s32.totalorder %s22, 3
      %p150 = por %p148, %p149
      %p152 = scmp.ne.s32.totalorder %s137, %s151
      %p153 = scmp.eq.s32.totalorder %s22, 0
      %p154 = por %p152, %p153
      %s156 = sadd.s32 %s155, 1
      %p159 = scmp.eq.s32.totalorder %s16, 3
      %p160 = scmp.ne.s32.totalorder %s155, %s157
      %p161 = scmp.eq.s32.totalorder %s16, 0
      %p162 = por %p160, %p161
      %p163 = scmp.ne.s32.totalorder %s155, %s157
      %p164 = scmp.eq.s32.totalorder %s21, 3
      %p165 = por %p163, %p164
      %p166 = scmp.ne.s32.totalorder %s157, %s158
      %p167 = scmp.eq.s32.totalorder %s21, 0
      %p168 = por %p166, %p167
      %p169 = scmp.ne.s32.totalorder %s157, %s158
      %p170 = scmp.eq.s32.totalorder %s22, 3
      %p171 = por %p169, %p170
      %p173 = scmp.ne.s32.totalorder %s158, %s172
      %p174 = scmp.eq.s32.totalorder %s22, 0
      %p175 = por %p173, %p174
      %s176 = ssub.s32 %s16, %s23
      %p177 = scmp.eq.s32.totalorder %s176, 0
      %s179 = sadd.s32 %s178, 1
      %s180 = scalar_select %p177, %s178, %s179
      %p183 = pneg %p177
      %p184 = scmp.eq.s32.totalorder %s16, 3
      %p185 = por %p183, %p184
      %p186 = scmp.ne.s32.totalorder %s178, %s181
      %p187 = scmp.eq.s32.totalorder %s16, 0
      %p188 = por %p186, %p187
      %p189 = scmp.ne.s32.totalorder %s178, %s181
      %p190 = scmp.eq.s32.totalorder %s21, 3
      %p191 = por %p189, %p190
      %p192 = scmp.ne.s32.totalorder %s181, %s182
      %p193 = scmp.eq.s32.totalorder %s21, 0
      %p194 = por %p192, %p193
      %p195 = scmp.ne.s32.totalorder %s181, %s182
      %p196 = scmp.eq.s32.totalorder %s22, 3
      %p197 = por %p195, %p196
      %p199 = scmp.ne.s32.totalorder %s182, %s198
      %p200 = scmp.eq.s32.totalorder %s22, 0
      %p201 = por %p199, %p200
      %p202 = scmp.le.s32.totalorder 1, %s16
      %p203 = scmp.lt.s32.totalorder %s16, 5
      %p204 = pnand %p202, %p203
      %p205 = pneg %p204
      // Predicated region
      $region9: #{tpu_custom_call.1} parent=5 // pred_check
        _
      $region10: #{tpu_custom_call.1} parent=5 // pred_check_branch
        %207 = sbr.rel (%p204) target = $region12
      $region11: #{tpu_custom_call.1} parent=5 // pred_region
        %s208 = ssub.s32 %s16, 1
        // Predicated region
        $region13: #{tpu_custom_call.1} parent=11 // pred_check
          %p209 = pneg %p63
        $region14: #{tpu_custom_call.1} parent=11 // pred_check_branch
          %211 = sbr.rel (%p209) target = $region16
        $region15: #{tpu_custom_call.1} parent=11 // pred_region
          _
        $region16: #{tpu_custom_call.1} parent=11 // pred_fallthru
          _
        // Predicated region
        $region17: #{tpu_custom_call.1} parent=11 // pred_check
          %p212 = pneg %p84
        $region18: #{tpu_custom_call.1} parent=11 // pred_check_branch
          %214 = sbr.rel (%p212) target = $region20
        $region19: #{tpu_custom_call.1} parent=11 // pred_region
          _
        $region20: #{tpu_custom_call.1} parent=11 // pred_fallthru
          _
        // Predicated region
        $region21: #{tpu_custom_call.1} parent=11 // pred_check
          %p215 = pneg %p105
        $region22: #{tpu_custom_call.1} parent=11 // pred_check_branch
          %217 = sbr.rel (%p215) target = $region24
        $region23: #{tpu_custom_call.1} parent=11 // pred_region
          _
        $region24: #{tpu_custom_call.1} parent=11 // pred_fallthru
          _
        // Predicated region
        $region25: #{tpu_custom_call.1} parent=11 // pred_check
          %p218 = pneg %p126
        $region26: #{tpu_custom_call.1} parent=11 // pred_check_branch
          %220 = sbr.rel (%p218) target = $region28
        $region27: #{tpu_custom_call.1} parent=11 // pred_region
          _
        $region28: #{tpu_custom_call.1} parent=11 // pred_fallthru
          _
        // Predicated region
        $region29: #{tpu_custom_call.1} parent=11 // pred_check
          %p221 = pneg %p147
        $region30: #{tpu_custom_call.1} parent=11 // pred_check_branch
          %223 = sbr.rel (%p221) target = $region32
        $region31: #{tpu_custom_call.1} parent=11 // pred_region
          _
        $region32: #{tpu_custom_call.1} parent=11 // pred_fallthru
          _
        // Predicated region
        $region33: #{tpu_custom_call.1} parent=11 // pred_check
          %p224 = pneg %p168
        $region34: #{tpu_custom_call.1} parent=11 // pred_check_branch
          %226 = sbr.rel (%p224) target = $region36
        $region35: #{tpu_custom_call.1} parent=11 // pred_region
          _
        $region36: #{tpu_custom_call.1} parent=11 // pred_fallthru
          _
      $region12: #{tpu_custom_call.1} parent=5 // pred_fallthru
        _
      %p227 = scmp.lt.s32.totalorder %s16, 4
      // Predicated region
      $region37: #{tpu_custom_call.1} parent=5 // pred_check
        %p228 = pneg %p227
      $region38: #{tpu_custom_call.1} parent=5 // pred_check_branch
        %230 = sbr.rel (%p228) target = $region40
      $region39: #{tpu_custom_call.1} parent=5 // pred_region
        // Predicated region
        $region41: #{tpu_custom_call.1} parent=39 // pred_check
          %p231 = pneg %p36
        $region42: #{tpu_custom_call.1} parent=39 // pred_check_branch
          %233 = sbr.rel (%p231) target = $region44
        $region43: #{tpu_custom_call.1} parent=39 // pred_region
          %s234 = smul.u32 32, %s16
          %p235 = scmp.lt.s32.totalorder %s234, 127
          %s236 = scalar_select %p235, %s234, 127
          %s237 = smul.addr %s236, 8
          %s238 = scalar_lea.vmem %s0, %s237
          %s239 = smul.u32 32, %s16
        $region44: #{tpu_custom_call.1} parent=39 // pred_fallthru
          _
      $region40: #{tpu_custom_call.1} parent=5 // pred_fallthru
        _
      %p240 = scmp.le.s32.totalorder 1, %s16
      %p241 = scmp.lt.s32.totalorder %s16, 5
      %p242 = pnand %p240, %p241
      %p243 = pneg %p242
      // Predicated region
      $region45: #{tpu_custom_call.1} parent=5 // pred_check
        _
      $region46: #{tpu_custom_call.1} parent=5 // pred_check_branch
        %245 = sbr.rel (%p242) target = $region48
      $region47: #{tpu_custom_call.1} parent=5 // pred_region
        %s246 = ssub.s32 %s16, 1
        %s247 = smul.u32 32, %s21
        %p248 = scmp.lt.s32.totalorder %s247, 127
        %s249 = scalar_select %p248, %s247, 127
        %s250 = smul.addr %s249, 8
        %s251 = scalar_lea.vmem %s0, %s250
        %p252 = pneg %p42
        %p253 = pneg %p39
        %p254 = pneg %p63
        %p255 = pneg %p60
        %p256 = pneg %p84
        %p257 = pneg %p81
        %p258 = pneg %p105
        %p259 = pneg %p102
        %p260 = pneg %p126
        %p261 = pneg %p123
        %p262 = pneg %p147
        %p263 = pneg %p144
        %p264 = pneg %p168
        %p265 = pneg %p165
        %p266 = pneg %p194
        %p267 = pneg %p191
        %s268 = sand.u32 %s181, 1
        %s269 = scalar_lea.sflag [#allocation3], %s268
        %s270 = sand.u32 %s181, 1
        %s271 = smul.addr %s270, 16
        %s272 = scalar_lea.vmem [#allocation2], %s271
        %s273 = smul.u32 32, %s21
        %p274 = scmp.lt.s32.totalorder %s273, 127
        %s275 = scalar_select %p274, %s273, 127
        %s276 = smul.addr %s275, 8
        %s277 = scalar_lea.vmem %s0, %s276
        %s278 = smul.u32 32, %s21
        %s279 = smul.u32 2, %s21
        %v281 = vld [vmem:[%s1] sm:$0xf]
        %v282 = vld [vmem:[%s1 + $0x4] sm:$0xf]
        %v283 = vld [vmem:[%s5] sm:$0xf]
        %v284 = vld [vmem:[%s2] sm:$0xff]
        %v285 = vld [vmem:[%s2 + $0x8] sm:$0xff]
        %v286 = vld [vmem:[%s6] sm:$0xff]
        %v287 = vld [vmem:[%s3] sm:$0xf]
        %v288 = vld [vmem:[%s3 + $0x4] sm:$0xf]
        %v289 = vld [vmem:[%s3 + $0x8] sm:$0xf]
        %v290 = vld [vmem:[%s3 + $0xc] sm:$0xf]
        %v291 = vld [vmem:[%s4] sm:$0xff]
        %v292 = vld [vmem:[%s4 + $0x8] sm:$0xff]
        %v293 = vld [vmem:[%s4 + $0x10] sm:$0xff]
        %v294 = vld [vmem:[%s4 + $0x18] sm:$0xff]
        %v295 = vld [vmem:[%s277] sm:$0xff]
        %v296 = vld [vmem:[%s277 + $0x8] sm:$0xff]
        %v297 = vld [vmem:[%s277 + $0x10] sm:$0xff]
        %v298 = vld [vmem:[%s277 + $0x18] sm:$0xff]
        %v299 = vld [vmem:[%s277 + $0x20] sm:$0xff]
        %v300 = vld [vmem:[%s277 + $0x28] sm:$0xff]
        %v301 = vld [vmem:[%s277 + $0x30] sm:$0xff]
        %v302 = vld [vmem:[%s277 + $0x38] sm:$0xff]
        %v303 = vld [vmem:[%s277 + $0x40] sm:$0xff]
        %v304 = vld [vmem:[%s277 + $0x48] sm:$0xff]
        %v305 = vld [vmem:[%s277 + $0x50] sm:$0xff]
        %v306 = vld [vmem:[%s277 + $0x58] sm:$0xff]
        %v307 = vld [vmem:[%s277 + $0x60] sm:$0xff]
        %v308 = vld [vmem:[%s277 + $0x68] sm:$0xff]
        %v309 = vld [vmem:[%s277 + $0x70] sm:$0xff]
        %v310 = vld [vmem:[%s277 + $0x78] sm:$0xff]
        %v311 = vld [vmem:[%s277 + $0x80] sm:$0xff]
        %v312 = vld [vmem:[%s277 + $0x88] sm:$0xff]
        %v313 = vld [vmem:[%s277 + $0x90] sm:$0xff]
        %v314 = vld [vmem:[%s277 + $0x98] sm:$0xff]
        %v315 = vld [vmem:[%s277 + $0xa0] sm:$0xff]
        %v316 = vld [vmem:[%s277 + $0xa8] sm:$0xff]
        %v317 = vld [vmem:[%s277 + $0xb0] sm:$0xff]
        %v318 = vld [vmem:[%s277 + $0xb8] sm:$0xff]
        %v319 = vld [vmem:[%s277 + $0xc0] sm:$0xff]
        %v320 = vld [vmem:[%s277 + $0xc8] sm:$0xff]
        %v321 = vld [vmem:[%s277 + $0xd0] sm:$0xff]
        %v322 = vld [vmem:[%s277 + $0xd8] sm:$0xff]
        %v323 = vld [vmem:[%s277 + $0xe0] sm:$0xff]
        %v324 = vld [vmem:[%s277 + $0xe8] sm:$0xff]
        %v325 = vld [vmem:[%s277 + $0xf0] sm:$0xff]
        %v326 = vld [vmem:[%s277 + $0xf8] sm:$0xff]
        %v327 = vpack.c.bf16 %v296, %v295
        %v328 = vpack.c.bf16 %v298, %v297
        %v329 = vpack.c.bf16 %v300, %v299
        %v330 = vpack.c.bf16 %v302, %v301
        %v331 = vpack.c.bf16 %v304, %v303
        %v332 = vpack.c.bf16 %v306, %v305
        %v333 = vpack.c.bf16 %v308, %v307
        %v334 = vpack.c.bf16 %v310, %v309
        %v335 = vpack.c.bf16 %v312, %v311
        %v336 = vpack.c.bf16 %v314, %v313
        %v337 = vpack.c.bf16 %v316, %v315
        %v338 = vpack.c.bf16 %v318, %v317
        %v339 = vpack.c.bf16 %v320, %v319
        %v340 = vpack.c.bf16 %v322, %v321
        %v341 = vpack.c.bf16 %v324, %v323
        %v342 = vpack.c.bf16 %v326, %v325
        %344 = vset.pattern.permute.xlu0 0
        %345 = vperm.xlu0 %344, %v284
        %v346 = vpop.permute.xlu0 %345
        %349 = vset.pattern.permute.xlu0 0
        %350 = vperm.xlu0 %349, %v285
        %v351 = vpop.permute.xlu0 %350
        %v355 = vunpack.c.l.b16 %v281
        %v356 = vunpack.c.l.b16 %v282
        %v357 = vpack.c.b16 %v356, %v355
        %vm358 = vcmask 261120
        %v360 = vsel %vm358, %v357, 0
        %v363 = vsel %vm358, %v327, 0
        %v366 = vsel %vm358, %v328, 0
        %v369 = vsel %vm358, %v329, 0
        %v372 = vsel %vm358, %v330, 0
        %v375 = vsel %vm358, %v331, 0
        %v378 = vsel %vm358, %v332, 0
        %v381 = vsel %vm358, %v333, 0
        %v384 = vsel %vm358, %v334, 0
        %v387 = vsel %vm358, %v335, 0
        %v390 = vsel %vm358, %v336, 0
        %v393 = vsel %vm358, %v337, 0
        %v396 = vsel %vm358, %v338, 0
        %v399 = vsel %vm358, %v339, 0
        %v402 = vsel %vm358, %v340, 0
        %v405 = vsel %vm358, %v341, 0
        %v408 = vsel %vm358, %v342, 0
        %410 = vmatprep.subr.bf16.mxu0 0
        %411 = vmatpush1.bf16.xpose.msra.mxu0 %v363
        %412 = vmatprep.subr.bf16.mxu0 0
        %413 = vmatpush1.bf16.xpose.msra.mxu0 %v366
        %414 = vmatprep.subr.bf16.mxu0 0
        %415 = vmatpush1.bf16.xpose.msra.mxu0 %v369
        %416 = vmatprep.subr.bf16.mxu0 0
        %417 = vmatpush1.bf16.xpose.msra.mxu0 %v372
        %418 = vmatprep.subr.bf16.mxu0 0
        %419 = vmatpush1.bf16.xpose.msra.mxu0 %v375
        %420 = vmatprep.subr.bf16.mxu0 0
        %421 = vmatpush1.bf16.xpose.msra.mxu0 %v378
        %422 = vmatprep.subr.bf16.mxu0 0
        %423 = vmatpush1.bf16.xpose.msra.mxu0 %v381
        %424 = vmatprep.subr.bf16.mxu0 0
        %425 = vmatpush1.bf16.xpose.msra.mxu0 %v384
        %426 = vmatprep.subr.bf16.mxu0 0
        %427 = vmatpush1.bf16.xpose.msra.mxu0 %v387
        %428 = vmatprep.subr.bf16.mxu0 0
        %429 = vmatpush1.bf16.xpose.msra.mxu0 %v390
        %430 = vmatprep.subr.bf16.mxu0 0
        %431 = vmatpush1.bf16.xpose.msra.mxu0 %v393
        %432 = vmatprep.subr.bf16.mxu0 0
        %433 = vmatpush1.bf16.xpose.msra.mxu0 %v396
        %434 = vmatprep.subr.bf16.mxu0 0
        %435 = vmatpush1.bf16.xpose.msra.mxu0 %v399
        %436 = vmatprep.subr.bf16.mxu0 0
        %437 = vmatpush1.bf16.xpose.msra.mxu0 %v402
        %438 = vmatprep.subr.bf16.mxu0 0
        %439 = vmatpush1.bf16.xpose.msra.mxu0 %v405
        %440 = vmatprep.subr.bf16.mxu0 0
        %441 = vmatpush1.bf16.xpose.msra.mxu0 %v408
        %442 = vmatprep.mubr.bf16.mxu0 0
        %443 = vmatmul.mubr.bf16.gmra.mrb[0].mxu0 %v360
        %v444 = vpop.f32.mrb[0].mxu0
        %v445 = vadd.f32 %v346, %v444
        %v446 = vpop.f32.mrb[0].mxu0
        %v447 = vadd.f32 %v346, %v446
        %v448 = vpop.f32.mrb[0].mxu0
        %v449 = vadd.f32 %v351, %v448
        %v450 = vpop.f32.mrb[0].mxu0
        %v451 = vadd.f32 %v351, %v450
        %452 = vdwg.mxu0
        %v453 = vmax.f32 %v445, 0.0
        %v454 = vmax.f32 %v447, 0.0
        %v455 = vmax.f32 %v449, 0.0
        %v456 = vmax.f32 %v451, 0.0
        %v457 = vpack.c.bf16 %v455, %v453
        %v458 = vpack.c.bf16 %v456, %v454
        %460 = vset.pattern.permute.xlu0 0
        %461 = vperm.xlu0 %460, %v291
        %v462 = vpop.permute.xlu0 %461
        %465 = vset.pattern.permute.xlu0 0
        %466 = vperm.xlu0 %465, %v292
        %v467 = vpop.permute.xlu0 %466
        %v471 = vunpack.c.l.b16 %v287
        %v472 = vunpack.c.l.b16 %v288
        %v473 = vpack.c.b16 %v472, %v471
        %vm474 = vcmask 130048
        %v476 = vsel %vm474, %v473, 0
        %478 = vmatprep.subr.bf16.mxu0 %v458
        %479 = vmatpush1.bf16.msra.mxu0 %v457
        %480 = vmatprep.subr.bf16.mxu0 0
        %481 = vmatpush1.bf16.msra.mxu0 0
        %482 = vmatprep.subr.bf16.mxu0 0
        %483 = vmatpush1.bf16.msra.mxu0 0
        %484 = vmatprep.subr.bf16.mxu0 0
        %485 = vmatpush1.bf16.msra.mxu0 0
        %486 = vmatprep.subr.bf16.mxu0 0
        %487 = vmatpush1.bf16.msra.mxu0 0
        %488 = vmatprep.subr.bf16.mxu0 0
        %489 = vmatpush1.bf16.msra.mxu0 0
        %490 = vmatprep.subr.bf16.mxu0 0
        %491 = vmatpush1.bf16.msra.mxu0 0
        %492 = vmatprep.subr.bf16.mxu0 0
        %493 = vmatpush1.bf16.msra.mxu0 0
        %494 = vmatprep.subr.bf16.mxu0 0
        %495 = vmatpush1.bf16.msra.mxu0 0
        %496 = vmatprep.subr.bf16.mxu0 0
        %497 = vmatpush1.bf16.msra.mxu0 0
        %498 = vmatprep.subr.bf16.mxu0 0
        %499 = vmatpush1.bf16.msra.mxu0 0
        %500 = vmatprep.subr.bf16.mxu0 0
        %501 = vmatpush1.bf16.msra.mxu0 0
        %502 = vmatprep.subr.bf16.mxu0 0
        %503 = vmatpush1.bf16.msra.mxu0 0
        %504 = vmatprep.subr.bf16.mxu0 0
        %505 = vmatpush1.bf16.msra.mxu0 0
        %506 = vmatprep.subr.bf16.mxu0 0
        %507 = vmatpush1.bf16.msra.mxu0 0
        %508 = vmatprep.subr.bf16.mxu0 0
        %509 = vmatpush1.bf16.msra.mxu0 0
        %510 = vmatprep.mubr.bf16.mxu0 0
        %511 = vmatmul.mubr.bf16.gmra.mrb[0].mxu0 %v476
        %v512 = vpop.f32.mrb[0].mxu0
        %v513 = vadd.f32 %v462, %v512
        %v514 = vpop.f32.mrb[0].mxu0
        %v515 = vadd.f32 %v462, %v514
        %v516 = vpop.f32.mrb[0].mxu0
        %v517 = vadd.f32 %v467, %v516
        %v518 = vpop.f32.mrb[0].mxu0
        %v519 = vadd.f32 %v467, %v518
        %520 = vdwg.mxu0
        %v521 = vmax.f32 %v513, 0.0
        %v522 = vmax.f32 %v515, 0.0
        %v523 = vmax.f32 %v517, 0.0
        %v524 = vmax.f32 %v519, 0.0
        %v525 = vpack.c.bf16 %v523, %v521
        %v526 = vpack.c.bf16 %v524, %v522
        %528 = vset.pattern.permute.xlu0 0
        %529 = vperm.xlu0 %528, %v293
        %v530 = vpop.permute.xlu0 %529
        %533 = vset.pattern.permute.xlu0 0
        %534 = vperm.xlu0 %533, %v294
        %v535 = vpop.permute.xlu0 %534
        %v539 = vunpack.c.l.b16 %v289
        %v540 = vunpack.c.l.b16 %v290
        %v541 = vpack.c.b16 %v540, %v539
        %v543 = vsel %vm474, %v541, 0
        %545 = vmatprep.subr.bf16.mxu0 %v526
        %546 = vmatpush1.bf16.msra.mxu0 %v525
        %547 = vmatprep.subr.bf16.mxu0 0
        %548 = vmatpush1.bf16.msra.mxu0 0
        %549 = vmatprep.subr.bf16.mxu0 0
        %550 = vmatpush1.bf16.msra.mxu0 0
        %551 = vmatprep.subr.bf16.mxu0 0
        %552 = vmatpush1.bf16.msra.mxu0 0
        %553 = vmatprep.subr.bf16.mxu0 0
        %554 = vmatpush1.bf16.msra.mxu0 0
        %555 = vmatprep.subr.bf16.mxu0 0
        %556 = vmatpush1.bf16.msra.mxu0 0
        %557 = vmatprep.subr.bf16.mxu0 0
        %558 = vmatpush1.bf16.msra.mxu0 0
        %559 = vmatprep.subr.bf16.mxu0 0
        %560 = vmatpush1.bf16.msra.mxu0 0
        %561 = vmatprep.subr.bf16.mxu0 0
        %562 = vmatpush1.bf16.msra.mxu0 0
        %563 = vmatprep.subr.bf16.mxu0 0
        %564 = vmatpush1.bf16.msra.mxu0 0
        %565 = vmatprep.subr.bf16.mxu0 0
        %566 = vmatpush1.bf16.msra.mxu0 0
        %567 = vmatprep.subr.bf16.mxu0 0
        %568 = vmatpush1.bf16.msra.mxu0 0
        %569 = vmatprep.subr.bf16.mxu0 0
        %570 = vmatpush1.bf16.msra.mxu0 0
        %571 = vmatprep.subr.bf16.mxu0 0
        %572 = vmatpush1.bf16.msra.mxu0 0
        %573 = vmatprep.subr.bf16.mxu0 0
        %574 = vmatpush1.bf16.msra.mxu0 0
        %575 = vmatprep.subr.bf16.mxu0 0
        %576 = vmatpush1.bf16.msra.mxu0 0
        %577 = vmatprep.mubr.bf16.mxu0 0
        %578 = vmatmul.mubr.bf16.gmra.mrb[0].mxu0 %v543
        %v579 = vpop.f32.mrb[0].mxu0
        %v580 = vadd.f32 %v530, %v579
        %v581 = vpop.f32.mrb[0].mxu0
        %v582 = vadd.f32 %v530, %v581
        %v583 = vpop.f32.mrb[0].mxu0
        %v584 = vadd.f32 %v535, %v583
        %v585 = vpop.f32.mrb[0].mxu0
        %v586 = vadd.f32 %v535, %v585
        %587 = vdwg.mxu0
        %v588 = vmax.f32 %v580, 0.0
        %v589 = vmax.f32 %v582, 0.0
        %v590 = vmax.f32 %v584, 0.0
        %v591 = vmax.f32 %v586, 0.0
        %v592 = vadd.f32 %v588, %v453
        %v593 = vadd.f32 %v589, %v454
        %v594 = vadd.f32 %v590, %v455
        %v595 = vadd.f32 %v591, %v456
        %v596 = vpack.c.bf16 %v594, %v592
        %v597 = vpack.c.bf16 %v595, %v593
        %599 = vset.pattern.permute.xlu0 0
        %600 = vperm.xlu0 %599, %v286
        %v601 = vpop.permute.xlu0 %600
        %v604 = vsel %vm474, %v283, 0
        %606 = vmatprep.subr.bf16.mxu0 %v597
        %607 = vmatpush1.bf16.msra.mxu0 %v596
        %608 = vmatprep.subr.bf16.mxu0 0
        %609 = vmatpush1.bf16.msra.mxu0 0
        %610 = vmatprep.subr.bf16.mxu0 0
        %611 = vmatpush1.bf16.msra.mxu0 0
        %612 = vmatprep.subr.bf16.mxu0 0
        %613 = vmatpush1.bf16.msra.mxu0 0
        %614 = vmatprep.subr.bf16.mxu0 0
        %615 = vmatpush1.bf16.msra.mxu0 0
        %616 = vmatprep.subr.bf16.mxu0 0
        %617 = vmatpush1.bf16.msra.mxu0 0
        %618 = vmatprep.subr.bf16.mxu0 0
        %619 = vmatpush1.bf16.msra.mxu0 0
        %620 = vmatprep.subr.bf16.mxu0 0
        %621 = vmatpush1.bf16.msra.mxu0 0
        %622 = vmatprep.subr.bf16.mxu0 0
        %623 = vmatpush1.bf16.msra.mxu0 0
        %624 = vmatprep.subr.bf16.mxu0 0
        %625 = vmatpush1.bf16.msra.mxu0 0
        %626 = vmatprep.subr.bf16.mxu0 0
        %627 = vmatpush1.bf16.msra.mxu0 0
        %628 = vmatprep.subr.bf16.mxu0 0
        %629 = vmatpush1.bf16.msra.mxu0 0
        %630 = vmatprep.subr.bf16.mxu0 0
        %631 = vmatpush1.bf16.msra.mxu0 0
        %632 = vmatprep.subr.bf16.mxu0 0
        %633 = vmatpush1.bf16.msra.mxu0 0
        %634 = vmatprep.subr.bf16.mxu0 0
        %635 = vmatpush1.bf16.msra.mxu0 0
        %636 = vmatprep.subr.bf16.mxu0 0
        %637 = vmatpush1.bf16.msra.mxu0 0
        %638 = vmatprep.mubr.bf16.mxu0 0
        %639 = vmatmul.mubr.bf16.gmra.mrb[0].mxu0 %v604
        %v640 = vpop.f32.mrb[0].mxu0
        %v641 = vadd.f32 %v601, %v640
        %v642 = vpop.f32.mrb[0].mxu0
        %v643 = vadd.f32 %v601, %v642
        %v644 = vpop.f32.mrb[0].mxu0
        %v645 = vpop.f32.mrb[0].mxu0
        %646 = vdwg.mxu0
        %v647 = vrot.slane %v641, 4
        %v648 = vmax.f32 %v641, %v647
        %v649 = vrot.slane %v648, 2
        %v650 = vmax.f32 %v648, %v649
        %v651 = vrot.slane %v650, 1
        %v652 = vmax.f32 %v650, %v651
        %v653 = vrot.slane %v643, 4
        %v654 = vmax.f32 %v643, %v653
        %v655 = vrot.slane %v654, 2
        %v656 = vmax.f32 %v654, %v655
        %v657 = vrot.slane %v656, 1
        %v658 = vmax.f32 %v656, %v657
        %v659 = vsub.f32 %v641, %v652
        %v660 = vsub.f32 %v643, %v658
        %v661 = vmul.f32 %v659, 1.442695
        %v662 = vpow.pop %v661
        %v663 = vmul.f32 %v660, 1.442695
        %v664 = vpow.pop %v663
        %v665 = vrot.slane %v662, 4
        %v666 = vadd.f32 %v662, %v665
        %v667 = vrot.slane %v666, 2
        %v668 = vadd.f32 %v666, %v667
        %v669 = vrot.slane %v668, 1
        %v670 = vadd.f32 %v668, %v669
        %v671 = vrot.slane %v664, 4
        %v672 = vadd.f32 %v664, %v671
        %v673 = vrot.slane %v672, 2
        %v674 = vadd.f32 %v672, %v673
        %v675 = vrot.slane %v674, 1
        %v676 = vadd.f32 %v674, %v675
        %v677 = vlog2.pop %v670
        %v678 = vmul.f32 %v677, 0.6931472
        %v679 = vlog2.pop %v676
        %v680 = vmul.f32 %v679, 0.6931472
        %v681 = vsub.f32 %v659, %v678
        %v682 = vsub.f32 %v660, %v680
        %683 = vst [vmem:[%s272] sm:$0xff] %v681
        %684 = vst [vmem:[%s272 + $0x8] sm:$0xff] %v682
        %s685 = sand.u32 %s181, 1
        %s686 = scalar_lea.sflag [#allocation3], %s685
        %s687 = sand.u32 %s181, 1
        %s688 = smul.addr %s687, 16
        %s689 = scalar_lea.vmem [#allocation2], %s688
        // Predicated region
        $region49: #{tpu_custom_call.1} parent=47 // pred_check
          %p690 = pneg %p191
        $region50: #{tpu_custom_call.1} parent=47 // pred_check_branch
          %692 = sbr.rel (%p690) target = $region52
        $region51: #{tpu_custom_call.1} parent=47 // pred_region
          %s693 = smul.u32 2, %s21
          %s695 = ssub.s32 256, 256
          %696 = vsyncadd %s686, %s695
          %s697 = smul.addr %s693, 128
          %s698 = scalar_lea.hbm %s7, %s697
          %s700 = sshll.u32 %s689, 4
          %s701 = int_to_ptr.vmem [resolvable:$true] %s700
          %703 = dma.vmem_to_hbm [thread:$0]  %s701, 256, %s698, %s686
        $region52: #{tpu_custom_call.1} parent=47 // pred_fallthru
          _
      $region48: #{tpu_custom_call.1} parent=5 // pred_fallthru
        _
      %p704 = scmp.le.s32.totalorder 2, %s16
      // Predicated region
      $region53: #{tpu_custom_call.1} parent=5 // pred_check
        %p705 = pneg %p704
      $region54: #{tpu_custom_call.1} parent=5 // pred_check_branch
        %707 = sbr.rel (%p705) target = $region56
      $region55: #{tpu_custom_call.1} parent=5 // pred_region
        %s708 = ssub.s32 %s16, 2
        // Predicated region
        $region57: #{tpu_custom_call.1} parent=55 // pred_check
          %p709 = pneg %p197
        $region58: #{tpu_custom_call.1} parent=55 // pred_check_branch
          %711 = sbr.rel (%p709) target = $region60
        $region59: #{tpu_custom_call.1} parent=55 // pred_region
          %s712 = sand.u32 %s182, 1
          %s713 = scalar_lea.sflag [#allocation3], %s712
          %s714 = sand.u32 %s182, 1
          %s715 = smul.addr %s714, 16
          %s716 = scalar_lea.vmem [#allocation2], %s715
          %717 = dma.done %s713, 256
        $region60: #{tpu_custom_call.1} parent=55 // pred_fallthru
          _
      $region56: #{tpu_custom_call.1} parent=5 // pred_fallthru
        _
    $region6: #{tpu_custom_call.1} parent=1 // loop_footer
      %s20 = sadd.s32 1, %s16
    $region7: #{tpu_custom_call.1} parent=1 // loop_footer_branch
      %15 = sbr.rel target = $region3
    $region8: #{tpu_custom_call.1} parent=1 // loop_exit
      _
    %718 = vsyncpa [#allocation3], 1
    %s719 = scalar_lea.sflag [#allocation3], 1
    %720 = vsyncpa %s719, 1

</llo_original>
